<compile_context>
chip_gen: v5e
topology: v5e:2x2
jax: 0.10.0
libtpu: 0.0.40
codegen_flags: <defaults>
</compile_context>

<pallas_src>
import functools

import numpy as np
import jax
import jax.numpy as jnp
from jax.experimental import pallas as pl
from jax.experimental.pallas import tpu as pltpu


# ----------------------------------------------------------------------------
# Primary path: zero-traffic identity (pl.ANY refs, aliased output, no DMA).
# ----------------------------------------------------------------------------
def _identity_noop_kernel(x_ref, o_ref):
    # The output buffer aliases the input buffer (input_output_aliases={0: 0})
    # and both refs live in pl.ANY (HBM), so no data movement is needed at
    # all: the output already holds x's bytes.  `touch` keeps a fake
    # read+write dependency on the aliased output so the call is well-formed
    # without generating any HBM<->VMEM DMA.
    del x_ref
    pltpu.touch(o_ref)


@functools.partial(jax.jit, donate_argnums=(0,))
def _identity_noop(x: jax.Array) -> jax.Array:
    return pl.pallas_call(
        _identity_noop_kernel,
        out_shape=jax.ShapeDtypeStruct(x.shape, x.dtype),
        in_specs=[pl.BlockSpec(memory_space=pl.ANY)],
        out_specs=pl.BlockSpec(memory_space=pl.ANY),
        input_output_aliases={0: 0},
    )(x)


# ----------------------------------------------------------------------------
# Fallback path: tiled, aliased, lane-dense copy (only if the no-op lowering
# is rejected).  Incorporates the review's copy-path fixes.
# ----------------------------------------------------------------------------
_BLOCK_BYTES = 8 * 1024 * 1024       # size blocks by bytes (~8 MiB), not rows
_VMEM_LIMIT = 48 * 1024 * 1024       # 2 bufs x (in+out) x 8 MiB = 32 MiB < 48
_LANE = 128


def _copy_kernel(x_ref, o_ref):
    o_ref[...] = x_ref[...]


def _sublane_multiple(itemsize: int) -> int:
    # Native sublane tile height: 8 rows for 4-byte, 16 for 2-byte, 32 for
    # 1-byte dtypes.
    return max(8, 32 // max(int(itemsize), 1))


def _lane_dense_layout(total: int):
    """Pick (rows, cols) with cols the largest 'nice' multiple of 128 dividing total."""
    for cols in (16384, 8192, 4096, 2048, 1024, 512, 256, 128):
        if total % cols == 0:
            return total // cols, cols
    return None


def _choose_block_rows(rows: int, cols: int, itemsize: int, sub: int) -> int:
    if rows <= sub:
        return rows                      # block == full array dims -> exemption
    budget = max(sub, (_BLOCK_BYTES // (cols * itemsize)) // sub * sub)
    block = min((rows // sub) * sub, budget)
    if block < sub:
        return rows
    # Prefer a block_rows that divides rows so the tail block is not a
    # ragged, masked-store tile — but never shrink below half the byte budget
    # just to find a divisor.
    cand = block
    while cand >= sub:
        if rows % cand == 0:
            if cand * 2 >= block:
                return cand
            break
        cand -= sub
    return block


@functools.partial(jax.jit, donate_argnums=(0,))
def _identity_copy(x: jax.Array) -> jax.Array:
    orig_shape = x.shape
    total = int(x.size)
    itemsize = int(jnp.dtype(x.dtype).itemsize)
    sub = _sublane_multiple(itemsize)

    layout = _lane_dense_layout(total)
    pad = 0
    if layout is None:
        # Hardened path (any rank, element count not divisible by 128): pad
        # the flat view up to a (sub x 128) multiple, copy, slice the pad off.
        chunk = sub * _LANE
        pad = (-total) % chunk
        flat = jnp.pad(x.reshape(total), (0, pad))
        rows, cols = (total + pad) // _LANE, _LANE
        x2d = flat.reshape(rows, cols)
    else:
        rows, cols = layout
        x2d = x.reshape(rows, cols)

    block_rows = _choose_block_rows(rows, cols, itemsize, sub)

    out2d = pl.pallas_call(
        _copy_kernel,
        out_shape=jax.ShapeDtypeStruct((rows, cols), x2d.dtype),
        grid=(pl.cdiv(rows, block_rows),),
        in_specs=[pl.BlockSpec((block_rows, cols), lambda i: (i, 0))],
        out_specs=pl.BlockSpec((block_rows, cols), lambda i: (i, 0)),
        # Output aliases the input buffer: no extra HBM allocation/writeback.
        input_output_aliases={0: 0},
        compiler_params=pltpu.CompilerParams(
            dimension_semantics=("parallel",),
            vmem_limit_bytes=_VMEM_LIMIT),
    )(x2d)

    out_flat = out2d.reshape(rows * cols)
    if pad:
        out_flat = out_flat[:total]
    return out_flat.reshape(orig_shape)


# ----------------------------------------------------------------------------
# Public entry point.
# ----------------------------------------------------------------------------
def unet_forward(x: jax.Array) -> jax.Array:
    """Exact equivalent of Unet.forward(x): identity.  Donates/aliases `x`."""
    try:
        return _identity_noop(x)
    except Exception:  # pragma: no cover — lowering fallback only
        # TODO(synk): drop the copy fallback once the no-op (pl.ANY + touch)
        # lowering is known-good on every deployed jax/libtpu version.
        return _identity_copy(x)


if __name__ == "__main__":
    key = jax.random.PRNGKey(0)
    # Latent-space input consistent with the module: the encoder's first conv
    # expects 4 input channels; spatial kept small for a synthetic run.
    x = jax.random.normal(key, (2, 4, 16, 16), dtype=jnp.float32)

    # Keep a host copy for verification: `x` is donated (aliased) to the output.
    x_host = np.asarray(jax.device_get(x))

    y = unet_forward(x)
    jax.block_until_ready(y)

    # Verify exact identity semantics (shape, dtype, values).
    assert y.shape == x_host.shape
    assert y.dtype == x_host.dtype
    assert np.array_equal(np.asarray(jax.device_get(y)), x_host), (
        "Unet.forward must be an identity map")

    print("KERNEL_OK")
</pallas_src>

<mosaic_0001>
module attributes {stable_mosaic.version = 11 : i64} {
  func.func @_identity_noop_kernel(%arg0: memref<2x4x16x16xf32, #tpu.memory_space<any>>, %arg1: memref<2x4x16x16xf32, #tpu.memory_space<any>>) attributes {dimension_semantics = [], scalar_prefetch = 0 : i64, scratch_operands = 0 : i64, tpu.core_type = #tpu.core_type<tc>} {
    return
  }
}

module attributes {stable_mosaic.version = 11 : i64} {
  func.func @_copy_kernel(%arg0: i32, %arg1: memref<1x2048xf32, #tpu.memory_space<vmem>>, %arg2: memref<1x2048xf32, #tpu.memory_space<vmem>>) attributes {dimension_semantics = [#tpu.dimension_semantics<parallel>], iteration_bounds = array<i64: 1>, scalar_prefetch = 0 : i64, scratch_operands = 0 : i64, tpu.core_type = #tpu.core_type<tc>, window_params = [{transform_indices = @transform_0, window_bounds = array<i64: 1, 2048>}, {transform_indices = @transform_1, window_bounds = array<i64: 1, 2048>}]} {
    %c0 = arith.constant 0 : index
    %c0_0 = arith.constant 0 : index
    %0 = vector.load %arg1[%c0, %c0_0] : memref<1x2048xf32, #tpu.memory_space<vmem>>, vector<1x2048xf32>
    %c0_1 = arith.constant 0 : index
    %c0_2 = arith.constant 0 : index
    %1 = vector.load %arg2[%c0_1, %c0_2] : memref<1x2048xf32, #tpu.memory_space<vmem>>, vector<1x2048xf32>
    tpu.vector_store %arg2[%c0_1, %c0_2], %0 {strides = array<i32>} : memref<1x2048xf32, #tpu.memory_space<vmem>>, vector<1x2048xf32>,
    return
  }
  func.func @transform_0(%arg0: i32) -> (i32, i32) {
    %c0_i32 = arith.constant 0 : i32
    %c0_i32_0 = arith.constant 0 : i32
    return %arg0, %c0_i32 : i32, i32
  }
  func.func @transform_1(%arg0: i32) -> (i32, i32) {
    %c0_i32 = arith.constant 0 : i32
    %c0_i32_0 = arith.constant 0 : i32
    return %arg0, %c0_i32 : i32, i32
  }
}

</mosaic_0001>

<llo_original>
// kernel: _identity_noop.1
$region0: #{_identity_noop.1}
  #allocation0 [shape = 'u32[]', space=smem, size = 0x4, offset = 0x4, fixed_abs, tag = 'smem constant byte address 0x4 - core index']
  #allocation1 [shape = 'u32[72,128]{1,0:T(1,128)}', space=vmem, size = 0x9000, scoped, tag = 'internal scratch']
  %s0 = inlined_call_operand.hbm [shape: f32[2,4,16,16], index: 0, kind: input, shape index: {}, may-alias: {0,1}]
  %s1 = inlined_call_operand.hbm [shape: f32[2,4,16,16], index: 1, kind: output, shape index: {}, may-alias: {0,1}]
  %s2 = sld [smem:[#allocation0]]
  $region2: #{_identity_noop.1} parent=0
    _
  %s4 = ssub.s32 1, %s2
  %s5 = scalar_select 0, %s4, %s2

// kernel: _identity_copy.1
$region0: #{_identity_copy.1}
  #allocation0 [shape = 'u32[]', space=smem, size = 0x4, offset = 0x4, fixed_abs, tag = 'smem constant byte address 0x4 - core index']
  #allocation1 [shape = 'u32[72,128]{1,0:T(1,128)}', space=vmem, size = 0x9000, scoped, tag = 'internal scratch']
  %s0 = inlined_call_operand.vmem [shape: f32[1,2048], index: 0, kind: input, shape index: {}, may-alias: {0,1}]
  %s1 = inlined_call_operand.vmem [shape: f32[1,2048], index: 1, kind: output, shape index: {}, may-alias: {0,1}]
  %s2 = sld [smem:[#allocation0]]
  $region14: #{_identity_copy.1} parent=0
    _
  %s4 = ssub.s32 1, %s2
  %s5 = scalar_select 0, %s4, %s2
  // Predicated region
  $region2: #{_identity_copy.1} parent=0 // pred_check
    _
  $region3: #{_identity_copy.1} parent=0 // pred_check_branch
    %7 = sbr.rel (0) target = $region5
  $region4: #{_identity_copy.1} parent=0 // pred_region
    _
  $region5: #{_identity_copy.1} parent=0 // pred_fallthru
    _
  %v8 = vld [vmem:[%s0] sm:$0xff]
  %v9 = vld [vmem:[%s0 + $0x8] sm:$0xff]
  %10 = vst [vmem:[%s1] sm:$0xff] %v8
  %11 = vst [vmem:[%s1 + $0x8] sm:$0xff] %v9
  // Predicated region
  $region6: #{_identity_copy.1} parent=0 // pred_check
    _
  $region7: #{_identity_copy.1} parent=0 // pred_check_branch
    %13 = sbr.rel (0) target = $region9
  $region8: #{_identity_copy.1} parent=0 // pred_region
    _
  $region9: #{_identity_copy.1} parent=0 // pred_fallthru
    _
  // Predicated region
  $region10: #{_identity_copy.1} parent=0 // pred_check
    _
  $region11: #{_identity_copy.1} parent=0 // pred_check_branch
    %15 = sbr.rel (0) target = $region13
  $region12: #{_identity_copy.1} parent=0 // pred_region
    _
  $region13: #{_identity_copy.1} parent=0 // pred_fallthru
    _

</llo_original>
